<compile_context>
chip_gen: v7x
topology: tpu7x:2x2x1
jax: 0.10.0
libtpu: 0.0.40
codegen_flags: <defaults>
</compile_context>

<pallas_src>
import functools

import jax
import jax.numpy as jnp
from jax import lax
from jax.experimental import pallas as pl
from jax.experimental.pallas import tpu as pltpu


def _mlp_kernel(x_ref, w1_ref, b1_ref, w2_ref, b2_ref, o_ref):
    # x_ref : (TB, 6)  batch tile (streamed from HBM)
    # w1_ref: (50, 6)  fc1 weight in PyTorch (out, in) layout
    # b1_ref: (50, 1)  fc1 bias as a column (lane-broadcast)
    # w2_ref: (50, 1)  fc2 weight as a column (lane-broadcast)
    # b2_ref: (1, 1)   fc2 bias
    # o_ref : (1, TB)  lane-dense output tile (batch on the lane axis)
    h = lax.dot_general(
        w1_ref[...], x_ref[...],
        dimension_numbers=(((1,), (1,)), ((), ())),   # contract both on the 6-dim
        preferred_element_type=jnp.float32,
    )                                                 # (50, TB) == W1 @ x^T
    h = jnp.maximum(h + b1_ref[...], 0.0)             # bias + ReLU (lane broadcast)
    y = jnp.sum(h * w2_ref[...], axis=0, keepdims=True)  # fc2 as VPU mul + sublane reduce
    o_ref[...] = (y + b2_ref[...]).astype(o_ref.dtype)   # (1, TB) full-lane store


def _round_up(n, m):
    return ((n + m - 1) // m) * m


@functools.partial(jax.jit, static_argnames=("tb",))
def forest_fire_forward(x, w1, b1, w2, b2, *, tb=4096):
    """x: (B, 6) f32; w1 (50, 6), b1 (50, 1), w2 (50, 1), b2 (1, 1). Returns (B, 1)."""
    B = x.shape[0]
    # Batch tile: multiple of 8 (sublane rule); multiple of 128 (lane-dense
    # output store) whenever more than one grid step is needed.
    if _round_up(B, 8) <= tb:
        TB = _round_up(B, 8)
    else:
        TB = _round_up(tb, 128)
    Bp = _round_up(B, TB)
    if Bp != B:
        x = jnp.pad(x, ((0, Bp - B), (0, 0)))  # padded rows give finite junk, sliced off below

    n_tiles = Bp // TB
    flops = 2 * Bp * (6 * 50 + 50)
    bytes_accessed = Bp * (6 + 1) * 4 + (50 * 6 + 50 + 50 + 1) * 4

    out = pl.pallas_call(
        _mlp_kernel,
        out_shape=jax.ShapeDtypeStruct((1, Bp), jnp.float32),
        grid_spec=pltpu.PrefetchScalarGridSpec(
            num_scalar_prefetch=0,
            grid=(n_tiles,),
            in_specs=[
                pl.BlockSpec((TB, 6), lambda i: (i, 0)),   # x tile: the only real HBM stream
                pl.BlockSpec((50, 6), lambda i: (0, 0)),   # w1 resident
                pl.BlockSpec((50, 1), lambda i: (0, 0)),   # b1 resident
                pl.BlockSpec((50, 1), lambda i: (0, 0)),   # w2 resident
                pl.BlockSpec((1, 1), lambda i: (0, 0)),    # b2 resident
            ],
            out_specs=pl.BlockSpec((1, TB), lambda i: (0, i)),
        ),
        compiler_params=pltpu.CompilerParams(
            dimension_semantics=("parallel",),     # independent batch tiles
            vmem_limit_bytes=48 << 20,             # fits v7x's 64 MiB VMEM with headroom
        ),
        cost_estimate=pl.CostEstimate(
            flops=flops, transcendentals=0, bytes_accessed=bytes_accessed),
    )(x, w1, b1, w2, b2)

    # (1, Bp) -> (Bp, 1) is a free contiguous reshape; then drop the pad rows.
    return out.reshape(Bp, 1)[:B]


def init_params(key):
    # Mirrors nn.Linear shapes: fc1.weight (50, 6), fc1.bias (50,),
    # fc2.weight (1, 50) stored as a (50, 1) column, fc2.bias (1,) as (1, 1).
    k1, k2, k3, k4 = jax.random.split(key, 4)
    bound1 = 1.0 / jnp.sqrt(6.0)
    bound2 = 1.0 / jnp.sqrt(50.0)
    w1 = jax.random.uniform(k1, (50, 6), jnp.float32, -bound1, bound1)
    b1 = jax.random.uniform(k2, (50, 1), jnp.float32, -bound1, bound1)
    w2 = jax.random.uniform(k3, (50, 1), jnp.float32, -bound2, bound2)
    b2 = jax.random.uniform(k4, (1, 1), jnp.float32, -bound2, bound2)
    return w1, b1, w2, b2


def _ref(x, w1, b1, w2, b2):
    return jnp.maximum(x @ w1.T + b1.T, 0.0) @ w2 + b2


if __name__ == "__main__":
    key = jax.random.PRNGKey(0)
    kx, kx2, kp = jax.random.split(key, 3)
    w1, b1, w2, b2 = init_params(kp)

    # Small batch (single tile, padded up to a sublane multiple).
    x = jax.random.normal(kx, (8, 6), jnp.float32)
    out = jax.block_until_ready(forest_fire_forward(x, w1, b1, w2, b2))
    assert out.shape == (8, 1)
    assert jnp.allclose(out, _ref(x, w1, b1, w2, b2), atol=1e-5, rtol=1e-5)

    # Multi-tile path with a ragged batch (exercises grid + tail padding +
    # the lane-dense (1, 128) output store).
    x2 = jax.random.normal(kx2, (300, 6), jnp.float32)
    out2 = jax.block_until_ready(forest_fire_forward(x2, w1, b1, w2, b2, tb=128))
    assert out2.shape == (300, 1)
    assert jnp.allclose(out2, _ref(x2, w1, b1, w2, b2), atol=1e-5, rtol=1e-5)

    print("KERNEL_OK")
</pallas_src>

<mosaic_0001>
module attributes {stable_mosaic.version = 11 : i64} {
  func.func @_mlp_kernel(%arg0: i32, %arg1: memref<8x6xf32, #tpu.memory_space<vmem>>, %arg2: memref<50x6xf32, #tpu.memory_space<vmem>>, %arg3: memref<50x1xf32, #tpu.memory_space<vmem>>, %arg4: memref<50x1xf32, #tpu.memory_space<vmem>>, %arg5: memref<1x1xf32, #tpu.memory_space<vmem>>, %arg6: memref<1x8xf32, #tpu.memory_space<vmem>>) attributes {dimension_semantics = [#tpu.dimension_semantics<parallel>], iteration_bounds = array<i64: 1>, scalar_prefetch = 0 : i64, scratch_operands = 0 : i64, tpu.core_type = #tpu.core_type<tc>, window_params = [{transform_indices = @transform_0, window_bounds = array<i64: 8, 6>}, {pipeline_mode = #tpu.pipeline_mode<synchronous>, transform_indices = @transform_1, window_bounds = array<i64: 50, 6>}, {pipeline_mode = #tpu.pipeline_mode<synchronous>, transform_indices = @transform_2, window_bounds = array<i64: 50, 1>}, {pipeline_mode = #tpu.pipeline_mode<synchronous>, transform_indices = @transform_3, window_bounds = array<i64: 50, 1>}, {pipeline_mode = #tpu.pipeline_mode<synchronous>, transform_indices = @transform_4, window_bounds = array<i64: 1, 1>}, {transform_indices = @transform_5, window_bounds = array<i64: 1, 8>}]} {
    %c0 = arith.constant 0 : index
    %c0_0 = arith.constant 0 : index
    %0 = vector.load %arg2[%c0, %c0_0] : memref<50x6xf32, #tpu.memory_space<vmem>>, vector<50x6xf32>
    %c0_1 = arith.constant 0 : index
    %c0_2 = arith.constant 0 : index
    %1 = vector.load %arg1[%c0_1, %c0_2] : memref<8x6xf32, #tpu.memory_space<vmem>>, vector<8x6xf32>
    %cst = arith.constant dense<0.000000e+00> : vector<50x8xf32>
    %2 = tpu.matmul %0, %1, %cst {dimension_numbers = #tpu.dot_dimension_numbers<[1], [1], [0], [0], [0, 0, 1, 0], [], []>} : vector<50x6xf32>, vector<8x6xf32>, vector<50x8xf32> -> vector<50x8xf32>
    %c0_3 = arith.constant 0 : index
    %c0_4 = arith.constant 0 : index
    %3 = vector.load %arg3[%c0_3, %c0_4] : memref<50x1xf32, #tpu.memory_space<vmem>>, vector<50x1xf32>
    %4 = vector.broadcast %3 : vector<50x1xf32> to vector<50x8xf32>
    %5 = arith.addf %2, %4 : vector<50x8xf32>
    %cst_5 = arith.constant 0.000000e+00 : f32
    %6 = vector.broadcast %cst_5 : f32 to vector<50x8xf32>
    %7 = arith.maximumf %5, %6 : vector<50x8xf32>
    %c0_6 = arith.constant 0 : index
    %c0_7 = arith.constant 0 : index
    %8 = vector.load %arg4[%c0_6, %c0_7] : memref<50x1xf32, #tpu.memory_space<vmem>>, vector<50x1xf32>
    %9 = vector.broadcast %8 : vector<50x1xf32> to vector<50x8xf32>
    %10 = arith.mulf %7, %9 : vector<50x8xf32>
    %cst_8 = arith.constant dense<0.000000e+00> : vector<8xf32>
    %11 = vector.multi_reduction <add>, %10, %cst_8 [0] : vector<50x8xf32> to vector<8xf32>
    %12 = vector.shape_cast %11 : vector<8xf32> to vector<1x8xf32>
    %c0_9 = arith.constant 0 : index
    %c0_10 = arith.constant 0 : index
    %13 = vector.load %arg5[%c0_9, %c0_10] : memref<1x1xf32, #tpu.memory_space<vmem>>, vector<1x1xf32>
    %14 = vector.broadcast %13 : vector<1x1xf32> to vector<1x8xf32>
    %15 = arith.addf %12, %14 : vector<1x8xf32>
    %c0_11 = arith.constant 0 : index
    %c0_12 = arith.constant 0 : index
    %16 = vector.load %arg6[%c0_11, %c0_12] : memref<1x8xf32, #tpu.memory_space<vmem>>, vector<1x8xf32>
    tpu.vector_store %arg6[%c0_11, %c0_12], %15 {strides = array<i32>} : memref<1x8xf32, #tpu.memory_space<vmem>>, vector<1x8xf32>,
    return
  }
  func.func @transform_0(%arg0: i32) -> (i32, i32) {
    %c0_i32 = arith.constant 0 : i32
    %c0_i32_0 = arith.constant 0 : i32
    return %arg0, %c0_i32 : i32, i32
  }
  func.func @transform_1(%arg0: i32) -> (i32, i32) {
    %c0_i32 = arith.constant 0 : i32
    %c0_i32_0 = arith.constant 0 : i32
    %c0_i32_1 = arith.constant 0 : i32
    return %c0_i32, %c0_i32_0 : i32, i32
  }
  func.func @transform_2(%arg0: i32) -> (i32, i32) {
    %c0_i32 = arith.constant 0 : i32
    %c0_i32_0 = arith.constant 0 : i32
    %c0_i32_1 = arith.constant 0 : i32
    return %c0_i32, %c0_i32_0 : i32, i32
  }
  func.func @transform_3(%arg0: i32) -> (i32, i32) {
    %c0_i32 = arith.constant 0 : i32
    %c0_i32_0 = arith.constant 0 : i32
    %c0_i32_1 = arith.constant 0 : i32
    return %c0_i32, %c0_i32_0 : i32, i32
  }
  func.func @transform_4(%arg0: i32) -> (i32, i32) {
    %c0_i32 = arith.constant 0 : i32
    %c0_i32_0 = arith.constant 0 : i32
    %c0_i32_1 = arith.constant 0 : i32
    return %c0_i32, %c0_i32_0 : i32, i32
  }
  func.func @transform_5(%arg0: i32) -> (i32, i32) {
    %c0_i32 = arith.constant 0 : i32
    %c0_i32_0 = arith.constant 0 : i32
    return %c0_i32, %arg0 : i32, i32
  }
}

</mosaic_0001>

<llo_original>
// kernel: forest_fire_forward.1
$region0: #{forest_fire_forward.1}
  #allocation0 [shape = 'u32[]', space=smem, size = 0x4, offset = 0x4, fixed_abs, tag = 'smem constant byte address 0x4 - core index']
  #allocation1 [shape = 'u32[144,128]{1,0:T(1,128)}', space=vmem, size = 0x12000, scoped, tag = 'internal scratch']
  #allocation2 [shape = 'f32[1,1]{1,0:T(1,128)S(1)}', space=vmem, size = 0x200, scoped, tag = 'scoped memory for forest_fire_forward.1']
  %s0 = inlined_call_operand.vmem [shape: f32[8,6], index: 0, kind: input, shape index: {}]
  %s1 = inlined_call_operand.vmem [shape: f32[50,6], index: 1, kind: input, shape index: {}]
  %s2 = inlined_call_operand.vmem [shape: f32[50,1], index: 2, kind: input, shape index: {}]
  %s3 = inlined_call_operand.vmem [shape: f32[50,1], index: 3, kind: input, shape index: {}]
  %s4 = inlined_call_operand.<no memory space> [shape: f32[1,1], index: 4, kind: input, shape index: {}]
  %s5 = inlined_call_operand.hbm [shape: f32[1,8], index: 5, kind: output, shape index: {}]
  %s6 = sld [smem:[#allocation0]]
  $region30: #{forest_fire_forward.1} parent=0
    _
  %s8 = ssub.s32 1, %s6
  %s9 = scalar_select 0, %s8, %s6
  %v10 = vstv %s4
  %11 = vst [vmem:[#allocation2] sm:$0x1] %v10
  $region1: #{forest_fire_forward.1} parent=0
    #allocation3 [shape = 'u8[512]{0}', space=vmem, size = 0x400, scoped, tag = 'output window, operand 0, single buffered']
    #allocation4 [shape = 's32[1]{0}', space=sflag, size = 0x4, scoped, tag = 'scoped memory for forest_fire_forward.1']
    %12 = vsyncpa [#allocation4], 0
    // Predicated region
    $region2: #{forest_fire_forward.1} parent=1 // pred_check
      _
    $region3: #{forest_fire_forward.1} parent=1 // pred_check_branch
      %14 = sbr.rel (0) target = $region5
    $region4: #{forest_fire_forward.1} parent=1 // pred_region
      _
    $region5: #{forest_fire_forward.1} parent=1 // pred_fallthru
      _
    // Predicated region
    $region6: #{forest_fire_forward.1} parent=1 // pred_check
      _
    $region7: #{forest_fire_forward.1} parent=1 // pred_check_branch
      %16 = sbr.rel (0) target = $region9
    $region8: #{forest_fire_forward.1} parent=1 // pred_region
      _
    $region9: #{forest_fire_forward.1} parent=1 // pred_fallthru
      _
    // Predicated region
    $region10: #{forest_fire_forward.1} parent=1 // pred_check
      _
    $region11: #{forest_fire_forward.1} parent=1 // pred_check_branch
      %18 = sbr.rel (0) target = $region13
    $region12: #{forest_fire_forward.1} parent=1 // pred_region
      _
    $region13: #{forest_fire_forward.1} parent=1 // pred_fallthru
      _
    // Predicated region
    $region14: #{forest_fire_forward.1} parent=1 // pred_check
      _
    $region15: #{forest_fire_forward.1} parent=1 // pred_check_branch
      %20 = sbr.rel (0) target = $region17
    $region16: #{forest_fire_forward.1} parent=1 // pred_region
      _
    $region17: #{forest_fire_forward.1} parent=1 // pred_fallthru
      _
    // Predicated region
    $region18: #{forest_fire_forward.1} parent=1 // pred_check
      _
    $region19: #{forest_fire_forward.1} parent=1 // pred_check_branch
      %22 = sbr.rel (0) target = $region21
    $region20: #{forest_fire_forward.1} parent=1 // pred_region
      _
    $region21: #{forest_fire_forward.1} parent=1 // pred_fallthru
      _
    %v23 = vld [vmem:[%s1] sm:$0xff]
    %v24 = vld [vmem:[%s1 + $0x8] sm:$0xff]
    %v25 = vld [vmem:[%s1 + $0x10] sm:$0xff]
    %v26 = vld [vmem:[%s1 + $0x18] sm:$0xff]
    %v27 = vld [vmem:[%s1 + $0x20] sm:$0xff]
    %v28 = vld [vmem:[%s1 + $0x28] sm:$0xff]
    %v29 = vld [vmem:[%s1 + $0x30] sm:$0x3]
    %v30 = vld [vmem:[%s0] sm:$0xff]
    %v31 = vld [vmem:[%s2] sm:$0xff]
    %v32 = vld [vmem:[%s2 + $0x8] sm:$0xff]
    %v33 = vld [vmem:[%s2 + $0x10] sm:$0xff]
    %v34 = vld [vmem:[%s2 + $0x18] sm:$0xff]
    %v35 = vld [vmem:[%s2 + $0x20] sm:$0xff]
    %v36 = vld [vmem:[%s2 + $0x28] sm:$0xff]
    %v37 = vld [vmem:[%s2 + $0x30] sm:$0x3]
    %39 = vset.pattern.permute.xlu0 0
    %40 = vperm.xlu0 %39, %v31
    %v41 = vpop.permute.xlu0 %40
    %44 = vset.pattern.permute.xlu0 0
    %45 = vperm.xlu0 %44, %v32
    %v46 = vpop.permute.xlu0 %45
    %49 = vset.pattern.permute.xlu0 0
    %50 = vperm.xlu0 %49, %v33
    %v51 = vpop.permute.xlu0 %50
    %54 = vset.pattern.permute.xlu0 0
    %55 = vperm.xlu0 %54, %v34
    %v56 = vpop.permute.xlu0 %55
    %59 = vset.pattern.permute.xlu0 0
    %60 = vperm.xlu0 %59, %v35
    %v61 = vpop.permute.xlu0 %60
    %64 = vset.pattern.permute.xlu0 0
    %65 = vperm.xlu0 %64, %v36
    %v66 = vpop.permute.xlu0 %65
    %69 = vset.pattern.permute.xlu0 0
    %70 = vperm.xlu0 %69, %v37
    %v71 = vpop.permute.xlu0 %70
    %vm73 = vcmask 48128
    %v75 = vsel %vm73, %v23, 0
    %v78 = vsel %vm73, %v24, 0
    %v81 = vsel %vm73, %v25, 0
    %v84 = vsel %vm73, %v26, 0
    %v87 = vsel %vm73, %v27, 0
    %v90 = vsel %vm73, %v28, 0
    %v93 = vsel %vm73, %v29, 0
    %v96 = vsel %vm73, %v30, 0
    %98 = vmatprep.subr.mxu0 0.0
    %99 = vmatpush1.xpose.msra.mxu0 %v96
    %100 = vmatprep.subr.mxu0 0.0
    %101 = vmatpush1.xpose.msra.mxu0 0.0
    %102 = vmatprep.subr.mxu0 0.0
    %103 = vmatpush1.xpose.msra.mxu0 0.0
    %104 = vmatprep.subr.mxu0 0.0
    %105 = vmatpush1.xpose.msra.mxu0 0.0
    %106 = vmatprep.subr.mxu0 0.0
    %107 = vmatpush1.xpose.msra.mxu0 0.0
    %108 = vmatprep.subr.mxu0 0.0
    %109 = vmatpush1.xpose.msra.mxu0 0.0
    %110 = vmatprep.subr.mxu0 0.0
    %111 = vmatpush1.xpose.msra.mxu0 0.0
    %112 = vmatprep.subr.mxu0 0.0
    %113 = vmatpush1.xpose.msra.mxu0 0.0
    %114 = vmatprep.subr.mxu0 0.0
    %115 = vmatpush1.xpose.msra.mxu0 0.0
    %116 = vmatprep.subr.mxu0 0.0
    %117 = vmatpush1.xpose.msra.mxu0 0.0
    %118 = vmatprep.subr.mxu0 0.0
    %119 = vmatpush1.xpose.msra.mxu0 0.0
    %120 = vmatprep.subr.mxu0 0.0
    %121 = vmatpush1.xpose.msra.mxu0 0.0
    %122 = vmatprep.subr.mxu0 0.0
    %123 = vmatpush1.xpose.msra.mxu0 0.0
    %124 = vmatprep.subr.mxu0 0.0
    %125 = vmatpush1.xpose.msra.mxu0 0.0
    %126 = vmatprep.subr.mxu0 0.0
    %127 = vmatpush1.xpose.msra.mxu0 0.0
    %128 = vmatprep.subr.mxu0 0.0
    %129 = vmatpush1.xpose.msra.mxu0 0.0
    %130 = vmatprep.subr.mxu0 0.0
    %131 = vmatpush1.xpose.msra.mxu0 0.0
    %132 = vmatprep.subr.mxu0 0.0
    %133 = vmatpush1.xpose.msra.mxu0 0.0
    %134 = vmatprep.subr.mxu0 0.0
    %135 = vmatpush1.xpose.msra.mxu0 0.0
    %136 = vmatprep.subr.mxu0 0.0
    %137 = vmatpush1.xpose.msra.mxu0 0.0
    %138 = vmatprep.subr.mxu0 0.0
    %139 = vmatpush1.xpose.msra.mxu0 0.0
    %140 = vmatprep.subr.mxu0 0.0
    %141 = vmatpush1.xpose.msra.mxu0 0.0
    %142 = vmatprep.subr.mxu0 0.0
    %143 = vmatpush1.xpose.msra.mxu0 0.0
    %144 = vmatprep.subr.mxu0 0.0
    %145 = vmatpush1.xpose.msra.mxu0 0.0
    %146 = vmatprep.subr.mxu0 0.0
    %147 = vmatpush1.xpose.msra.mxu0 0.0
    %148 = vmatprep.subr.mxu0 0.0
    %149 = vmatpush1.xpose.msra.mxu0 0.0
    %150 = vmatprep.subr.mxu0 0.0
    %151 = vmatpush1.xpose.msra.mxu0 0.0
    %152 = vmatprep.subr.mxu0 0.0
    %153 = vmatpush1.xpose.msra.mxu0 0.0
    %154 = vmatprep.subr.mxu0 0.0
    %155 = vmatpush1.xpose.msra.mxu0 0.0
    %156 = vmatprep.subr.mxu0 0.0
    %157 = vmatpush1.xpose.msra.mxu0 0.0
    %158 = vmatprep.subr.mxu0 0.0
    %159 = vmatpush1.xpose.msra.mxu0 0.0
    %160 = vmatprep.subr.mxu0 0.0
    %161 = vmatpush1.xpose.msra.mxu0 0.0
    %162 = vmatprep.mubr.f32.mxu0 0.0
    %163 = vmatmul.mubr.f32.gmra.mrb[0].mxu0 %v75
    %v164 = vpop.f32.mrb[0].mxu0
    %v165 = vadd.f32 %v41, %v164
    %v166 = vpop.f32.mrb[0].mxu0
    %167 = vmatprep.mubr.f32.mxu0 0.0
    %168 = vmatmul.mubr.f32.gmra.mrb[0].mxu0 %v78
    %v169 = vpop.f32.mrb[0].mxu0
    %v170 = vadd.f32 %v46, %v169
    %v171 = vpop.f32.mrb[0].mxu0
    %172 = vmatprep.mubr.f32.mxu0 0.0
    %173 = vmatmul.mubr.f32.gmra.mrb[0].mxu0 %v81
    %v174 = vpop.f32.mrb[0].mxu0
    %v175 = vadd.f32 %v51, %v174
    %v176 = vpop.f32.mrb[0].mxu0
    %177 = vmatprep.mubr.f32.mxu0 0.0
    %178 = vmatmul.mubr.f32.gmra.mrb[0].mxu0 %v84
    %v179 = vpop.f32.mrb[0].mxu0
    %v180 = vadd.f32 %v56, %v179
    %v181 = vpop.f32.mrb[0].mxu0
    %182 = vmatprep.mubr.f32.mxu0 0.0
    %183 = vmatmul.mubr.f32.gmra.mrb[0].mxu0 %v87
    %v184 = vpop.f32.mrb[0].mxu0
    %v185 = vadd.f32 %v61, %v184
    %v186 = vpop.f32.mrb[0].mxu0
    %187 = vmatprep.mubr.f32.mxu0 0.0
    %188 = vmatmul.mubr.f32.gmra.mrb[0].mxu0 %v90
    %v189 = vpop.f32.mrb[0].mxu0
    %v190 = vadd.f32 %v66, %v189
    %v191 = vpop.f32.mrb[0].mxu0
    %192 = vmatprep.mubr.f32.mxu0 0.0
    %193 = vmatmul.mubr.f32.gmra.mrb[0].mxu0 %v93
    %v194 = vpop.f32.mrb[0].mxu0
    %v195 = vadd.f32 %v71, %v194
    %v196 = vpop.f32.mrb[0].mxu0
    %197 = vdwg.mxu0
    %v198 = vmax.f32 %v165, 0.0
    %v199 = vmax.f32 %v170, 0.0
    %v200 = vmax.f32 %v175, 0.0
    %v201 = vmax.f32 %v180, 0.0
    %v202 = vmax.f32 %v185, 0.0
    %v203 = vmax.f32 %v190, 0.0
    %v204 = vmax.f32 %v195, 0.0
    %v205 = vld [vmem:[%s3] sm:$0xff]
    %v206 = vld [vmem:[%s3 + $0x8] sm:$0xff]
    %v207 = vld [vmem:[%s3 + $0x10] sm:$0xff]
    %v208 = vld [vmem:[%s3 + $0x18] sm:$0xff]
    %v209 = vld [vmem:[%s3 + $0x20] sm:$0xff]
    %v210 = vld [vmem:[%s3 + $0x28] sm:$0xff]
    %v211 = vld [vmem:[%s3 + $0x30] sm:$0x3]
    %213 = vset.pattern.permute.xlu0 0
    %214 = vperm.xlu0 %213, %v205
    %v215 = vpop.permute.xlu0 %214
    %218 = vset.pattern.permute.xlu0 0
    %219 = vperm.xlu0 %218, %v206
    %v220 = vpop.permute.xlu0 %219
    %223 = vset.pattern.permute.xlu0 0
    %224 = vperm.xlu0 %223, %v207
    %v225 = vpop.permute.xlu0 %224
    %228 = vset.pattern.permute.xlu0 0
    %229 = vperm.xlu0 %228, %v208
    %v230 = vpop.permute.xlu0 %229
    %233 = vset.pattern.permute.xlu0 0
    %234 = vperm.xlu0 %233, %v209
    %v235 = vpop.permute.xlu0 %234
    %238 = vset.pattern.permute.xlu0 0
    %239 = vperm.xlu0 %238, %v210
    %v240 = vpop.permute.xlu0 %239
    %243 = vset.pattern.permute.xlu0 0
    %244 = vperm.xlu0 %243, %v211
    %v245 = vpop.permute.xlu0 %244
    %v247 = vmul.f32 %v198, %v215
    %v248 = vmul.f32 %v199, %v220
    %v249 = vmul.f32 %v200, %v225
    %v250 = vmul.f32 %v201, %v230
    %v251 = vmul.f32 %v202, %v235
    %v252 = vmul.f32 %v203, %v240
    %v253 = vmul.f32 %v204, %v245
    %vm254 = vcmask 64512
    %v255 = vsel %vm254, %v247, 0.0
    %v256 = vsel %vm254, %v248, 0.0
    %v257 = vadd.f32 %v255, %v256
    %v258 = vsel %vm254, %v249, 0.0
    %v259 = vadd.f32 %v257, %v258
    %v260 = vsel %vm254, %v250, 0.0
    %v261 = vadd.f32 %v259, %v260
    %v262 = vsel %vm254, %v251, 0.0
    %v263 = vadd.f32 %v261, %v262
    %v264 = vsel %vm254, %v252, 0.0
    %v265 = vadd.f32 %v263, %v264
    %vm266 = vcmask 58368
    %v267 = vsel %vm266, %v253, 0.0
    %v268 = vadd.f32 %v265, %v267
    %v269 = vrot.slane %v268, 4
    %v270 = vadd.f32 %v268, %v269
    %v271 = vrot.slane %v270, 2
    %v272 = vadd.f32 %v270, %v271
    %v273 = vrot.slane %v272, 1
    %v274 = vadd.f32 %v272, %v273
    %v275 = vld [vmem:[#allocation2] sm:$0x1]
    %277 = vset.pattern.permute.xlu0 0
    %278 = vperm.xlu0 %277, %v275
    %v279 = vpop.permute.xlu0 %278
    %v281 = vlaneseq
    %v282 = vshrl.u32 %v281, 7
    %v283 = vsub.s32 0, %v282
    %v284 = vrot.slane %v279, %v283
    %v285 = vadd.f32 %v274, %v284
    %vm286 = vcmask 57344
    %287 = vst.msk [vmem:[#allocation3] sm:$0x1] %vm286, %v285
    // Predicated region
    $region22: #{forest_fire_forward.1} parent=1 // pred_check
      _
    $region23: #{forest_fire_forward.1} parent=1 // pred_check_branch
      %289 = sbr.rel (0) target = $region25
    $region24: #{forest_fire_forward.1} parent=1 // pred_region
      %s291 = ssub.s32 16, 16
      %292 = vsyncadd [#allocation4], %s291
      %s294 = sshll.u32 [#allocation3], 4
      %s295 = int_to_ptr.vmem [resolvable:$true] %s294
      %297 = dma.vmem_to_hbm [thread:$0]  %s295, 16, %s5, [#allocation4]
    $region25: #{forest_fire_forward.1} parent=1 // pred_fallthru
      _
    // Predicated region
    $region26: #{forest_fire_forward.1} parent=1 // pred_check
      _
    $region27: #{forest_fire_forward.1} parent=1 // pred_check_branch
      %299 = sbr.rel (0) target = $region29
    $region28: #{forest_fire_forward.1} parent=1 // pred_region
      %300 = dma.done [#allocation4], 16
    $region29: #{forest_fire_forward.1} parent=1 // pred_fallthru
      _
    %301 = vsyncpa [#allocation4], 1

</llo_original>
